<compile_context>
chip_gen: v7x
topology: tpu7x:2x2x1
jax: 0.10.0
libtpu: 0.0.40
codegen_flags: <defaults>
</compile_context>

<pallas_src>
import jax
import jax.numpy as jnp
import numpy as np
from jax.experimental import pallas as pl

# ---------------- problem sizes (small, consistent with the module) ----------
B = 2                      # batch size
NGRAPHS = 4                # g.batch_size
NPG = 8                    # nodes per subgraph
N = NGRAPHS * NPG          # total nodes in the batched graph = 32
IN_DIM = 16                # in_dim
G1 = 16                    # gcn_dim1
G2 = 16                    # gcn_dim2
N_CLASS = 4                # n_class
FINAL_DIM = NGRAPHS * G2   # 64
BN_ROWS = B * N            # 64 rows once the batch is folded into the node axis


# ---------------- Pallas kernel: whole batch in one invocation ---------------
def gcn_classifier_kernel(x_ref, a_ref, w1_ref, c1_ref, w2_ref, c2_ref,
                          mask_ref, wc_ref, rsum_ref, bias_ref, out_ref):
    a = a_ref[...]                                   # (B*N, B*N) block-diag A_hat
    x = x_ref[...]                                   # (B*N, IN_DIM) stacked node feats

    # GraphConv 1 (BNg1 folded into W1'/c1) + ReLU
    ax = jnp.dot(a, x, preferred_element_type=jnp.float32)              # (B*N, IN_DIM)
    h1 = jnp.dot(ax, w1_ref[...], preferred_element_type=jnp.float32)   # (B*N, G1)
    h1 = jnp.maximum(h1 + c1_ref[...], 0.0)

    # GraphConv 2 (BNg2 folded; W2 "widened": column block k repeats W2', so
    # z[:, k*G2+f] == H2[:, f] for every subgraph slot k) + ReLU
    ah = jnp.dot(a, h1, preferred_element_type=jnp.float32)             # (B*N, G1)
    z = jnp.dot(ah, w2_ref[...], preferred_element_type=jnp.float32)    # (B*N, NGRAPHS*G2)
    z = jnp.maximum(z + c2_ref[...], 0.0)

    # mask[n, k*G2+f] = (node n in subgraph k) * 1/NPG * BN1_scale[k*G2+f]
    # -> (z*mask) @ wc gives per-node class contributions; summing the rows of
    #    each sample (rsum) reproduces mean_nodes + flatten + norm1 + classify.
    s = jnp.dot(z * mask_ref[...], wc_ref[...],
                preferred_element_type=jnp.float32)                     # (B*N, N_CLASS)
    logits = jnp.dot(rsum_ref[...], s,
                     preferred_element_type=jnp.float32) + bias_ref[...]  # (B, N_CLASS)

    # softmax over classes
    m = jnp.max(logits, axis=-1, keepdims=True)
    e = jnp.exp(logits - m)
    out_ref[...] = e / jnp.sum(e, axis=-1, keepdims=True)


def gcn_classifier_forward(x_flat, a_hat, pool, raw_params):
    (w1, b1, s1, t1, w2, b2, s2, t2, s3, t3, wc) = raw_params

    # glue: exactly torch.reshape + transpose(1, 2), then fold batch into rows
    x_all = jnp.transpose(x_flat.reshape(B, IN_DIM, N), (0, 2, 1)).reshape(BN_ROWS, IN_DIM)

    # ---------------- host-side constant folding ----------------
    w1f = w1 * s1[None, :]                       # BNg1 scale into W1
    c1 = (b1 * s1 + t1)[None, :]                 # (1, G1)
    w2f = w2 * s2[None, :]                       # BNg2 scale into W2
    c2 = (b2 * s2 + t2)[None, :]                 # (1, G2)
    w2wide = jnp.tile(w2f, (1, NGRAPHS))         # (G1, NGRAPHS*G2)
    c2wide = jnp.tile(c2, (1, NGRAPHS))          # (1, NGRAPHS*G2)

    # block-diagonal adjacency / per-sample row-sum matrix (A_hat is batch-invariant)
    eye_b = jnp.eye(B, dtype=jnp.float32)
    abig = jnp.kron(eye_b, a_hat)                                  # (B*N, B*N)
    rsum = jnp.kron(eye_b, jnp.ones((1, N), jnp.float32))          # (B, B*N)

    # mean-pool + flatten + BN1 scale folded into one per-node mask
    mask_node = jnp.kron(pool.T, jnp.ones((1, G2), jnp.float32))   # (N, FINAL_DIM)
    mask = jnp.tile(mask_node * s3[None, :], (B, 1))               # (B*N, FINAL_DIM)

    # BN1 shift folded through the (bias-free) classifier into a logit bias
    bias_c = (t3 @ wc)[None, :]                                    # (1, N_CLASS)

    return pl.pallas_call(
        gcn_classifier_kernel,
        out_shape=jax.ShapeDtypeStruct((B, N_CLASS), jnp.float32),
    )(x_all, abig, w1f, c1, w2wide, c2wide, mask, wc, rsum, bias_c)


# ---------------- deterministic synthetic graph / parameters -----------------
def build_graph():
    # block-diagonal batched graph: NGRAPHS rings of NPG nodes, no self loops
    adj = np.zeros((N, N), np.float32)
    for g in range(NGRAPHS):
        off = g * NPG
        for i in range(NPG):
            adj[off + i, off + (i + 1) % NPG] = 1.0
            adj[off + (i + 1) % NPG, off + i] = 1.0
    deg = adj.sum(axis=1)
    d_inv_sqrt = 1.0 / np.sqrt(np.maximum(deg, 1.0))
    a_hat = (d_inv_sqrt[:, None] * adj) * d_inv_sqrt[None, :]   # D^-1/2 A D^-1/2

    pool = np.zeros((NGRAPHS, N), np.float32)                   # mean_nodes matrix
    for g in range(NGRAPHS):
        pool[g, g * NPG:(g + 1) * NPG] = 1.0 / NPG
    return jnp.asarray(a_hat), jnp.asarray(pool)


def bn_affine(key, dim, eps=1e-5):
    k1, k2, k3, k4 = jax.random.split(key, 4)
    gamma = 1.0 + 0.1 * jax.random.normal(k1, (dim,), jnp.float32)
    beta = 0.1 * jax.random.normal(k2, (dim,), jnp.float32)
    rmean = 0.1 * jax.random.normal(k3, (dim,), jnp.float32)
    rvar = 1.0 + 0.1 * jnp.abs(jax.random.normal(k4, (dim,), jnp.float32))
    scale = gamma / jnp.sqrt(rvar + eps)
    shift = beta - rmean * scale
    return scale, shift


def build_params(key):
    ks = jax.random.split(key, 8)
    w1 = 0.2 * jax.random.normal(ks[0], (IN_DIM, G1), jnp.float32)
    b1 = 0.1 * jax.random.normal(ks[1], (G1,), jnp.float32)
    w2 = 0.2 * jax.random.normal(ks[2], (G1, G2), jnp.float32)
    b2 = 0.1 * jax.random.normal(ks[3], (G2,), jnp.float32)
    s1, t1 = bn_affine(ks[4], G1)
    s2, t2 = bn_affine(ks[5], G2)
    s3, t3 = bn_affine(ks[6], FINAL_DIM)
    wc = 0.2 * jax.random.normal(ks[7], (FINAL_DIM, N_CLASS), jnp.float32)
    return (w1, b1, s1, t1, w2, b2, s2, t2, s3, t3, wc)


# ---------------- pure-JAX reference (module-faithful, unfolded) -------------
def reference_forward(x_flat, a_hat, pool, raw_params):
    (w1, b1, s1, t1, w2, b2, s2, t2, s3, t3, wc) = raw_params
    x3 = jnp.transpose(x_flat.reshape(B, IN_DIM, N), (0, 2, 1))

    def per_sample(xb):
        h1 = jnp.maximum((a_hat @ xb @ w1 + b1) * s1 + t1, 0.0)
        h2 = jnp.maximum((a_hat @ h1 @ w2 + b2) * s2 + t2, 0.0)
        flat = (pool @ h2).reshape(-1)          # mean_nodes + flatten
        flat = flat * s3 + t3                   # norm1 (eval) ; dropout == identity
        return jax.nn.softmax(flat @ wc)

    return jax.vmap(per_sample)(x3)


if __name__ == "__main__":
    key = jax.random.PRNGKey(0)
    kx, kp = jax.random.split(key)
    x = jax.random.normal(kx, (B, IN_DIM * N), jnp.float32)   # (2, 512)
    a_hat, pool = build_graph()
    params = build_params(kp)

    out = gcn_classifier_forward(x, a_hat, pool, params)
    out = jax.block_until_ready(out)

    ref = reference_forward(x, a_hat, pool, params)
    np.testing.assert_allclose(np.asarray(out), np.asarray(ref), rtol=1e-4, atol=2e-5)
    # TODO(synk): training-mode BatchNorm / Dropout are stochastic-statistics ops;
    # implemented here in eval mode (running-stat affine / identity).
    print("KERNEL_OK")
</pallas_src>

<mosaic_0001>
module attributes {stable_mosaic.version = 11 : i64} {
  func.func @gcn_classifier_kernel(%arg0: memref<64x16xf32, #tpu.memory_space<vmem>>, %arg1: memref<64x64xf32, #tpu.memory_space<vmem>>, %arg2: memref<16x16xf32, #tpu.memory_space<vmem>>, %arg3: memref<1x16xf32, #tpu.memory_space<vmem>>, %arg4: memref<16x64xf32, #tpu.memory_space<vmem>>, %arg5: memref<1x64xf32, #tpu.memory_space<vmem>>, %arg6: memref<64x64xf32, #tpu.memory_space<vmem>>, %arg7: memref<64x4xf32, #tpu.memory_space<vmem>>, %arg8: memref<2x64xf32, #tpu.memory_space<vmem>>, %arg9: memref<1x4xf32, #tpu.memory_space<vmem>>, %arg10: memref<2x4xf32, #tpu.memory_space<vmem>>) attributes {dimension_semantics = [], scalar_prefetch = 0 : i64, scratch_operands = 0 : i64, tpu.core_type = #tpu.core_type<tc>} {
    %c0 = arith.constant 0 : index
    %c0_0 = arith.constant 0 : index
    %0 = vector.load %arg1[%c0, %c0_0] : memref<64x64xf32, #tpu.memory_space<vmem>>, vector<64x64xf32>
    %c0_1 = arith.constant 0 : index
    %c0_2 = arith.constant 0 : index
    %1 = vector.load %arg0[%c0_1, %c0_2] : memref<64x16xf32, #tpu.memory_space<vmem>>, vector<64x16xf32>
    %cst = arith.constant dense<0.000000e+00> : vector<64x16xf32>
    %2 = tpu.matmul %0, %1, %cst {dimension_numbers = #tpu.dot_dimension_numbers<[1], [0], [0], [1], [0, 0, 1, 1], [], []>} : vector<64x64xf32>, vector<64x16xf32>, vector<64x16xf32> -> vector<64x16xf32>
    %c0_3 = arith.constant 0 : index
    %c0_4 = arith.constant 0 : index
    %3 = vector.load %arg2[%c0_3, %c0_4] : memref<16x16xf32, #tpu.memory_space<vmem>>, vector<16x16xf32>
    %cst_5 = arith.constant dense<0.000000e+00> : vector<64x16xf32>
    %4 = tpu.matmul %2, %3, %cst_5 {dimension_numbers = #tpu.dot_dimension_numbers<[1], [0], [0], [1], [0, 0, 1, 1], [], []>} : vector<64x16xf32>, vector<16x16xf32>, vector<64x16xf32> -> vector<64x16xf32>
    %c0_6 = arith.constant 0 : index
    %c0_7 = arith.constant 0 : index
    %5 = vector.load %arg3[%c0_6, %c0_7] : memref<1x16xf32, #tpu.memory_space<vmem>>, vector<1x16xf32>
    %6 = vector.broadcast %5 : vector<1x16xf32> to vector<64x16xf32>
    %7 = arith.addf %4, %6 : vector<64x16xf32>
    %cst_8 = arith.constant 0.000000e+00 : f32
    %8 = vector.broadcast %cst_8 : f32 to vector<64x16xf32>
    %9 = arith.maximumf %7, %8 : vector<64x16xf32>
    %cst_9 = arith.constant dense<0.000000e+00> : vector<64x16xf32>
    %10 = tpu.matmul %0, %9, %cst_9 {dimension_numbers = #tpu.dot_dimension_numbers<[1], [0], [0], [1], [0, 0, 1, 1], [], []>} : vector<64x64xf32>, vector<64x16xf32>, vector<64x16xf32> -> vector<64x16xf32>
    %c0_10 = arith.constant 0 : index
    %c0_11 = arith.constant 0 : index
    %11 = vector.load %arg4[%c0_10, %c0_11] : memref<16x64xf32, #tpu.memory_space<vmem>>, vector<16x64xf32>
    %cst_12 = arith.constant dense<0.000000e+00> : vector<64x64xf32>
    %12 = tpu.matmul %10, %11, %cst_12 {dimension_numbers = #tpu.dot_dimension_numbers<[1], [0], [0], [1], [0, 0, 1, 1], [], []>} : vector<64x16xf32>, vector<16x64xf32>, vector<64x64xf32> -> vector<64x64xf32>
    %c0_13 = arith.constant 0 : index
    %c0_14 = arith.constant 0 : index
    %13 = vector.load %arg5[%c0_13, %c0_14] : memref<1x64xf32, #tpu.memory_space<vmem>>, vector<1x64xf32>
    %14 = vector.broadcast %13 : vector<1x64xf32> to vector<64x64xf32>
    %15 = arith.addf %12, %14 : vector<64x64xf32>
    %cst_15 = arith.constant 0.000000e+00 : f32
    %16 = vector.broadcast %cst_15 : f32 to vector<64x64xf32>
    %17 = arith.maximumf %15, %16 : vector<64x64xf32>
    %c0_16 = arith.constant 0 : index
    %c0_17 = arith.constant 0 : index
    %18 = vector.load %arg6[%c0_16, %c0_17] : memref<64x64xf32, #tpu.memory_space<vmem>>, vector<64x64xf32>
    %19 = arith.mulf %17, %18 : vector<64x64xf32>
    %c0_18 = arith.constant 0 : index
    %c0_19 = arith.constant 0 : index
    %20 = vector.load %arg7[%c0_18, %c0_19] : memref<64x4xf32, #tpu.memory_space<vmem>>, vector<64x4xf32>
    %cst_20 = arith.constant dense<0.000000e+00> : vector<64x4xf32>
    %21 = tpu.matmul %19, %20, %cst_20 {dimension_numbers = #tpu.dot_dimension_numbers<[1], [0], [0], [1], [0, 0, 1, 1], [], []>} : vector<64x64xf32>, vector<64x4xf32>, vector<64x4xf32> -> vector<64x4xf32>
    %c0_21 = arith.constant 0 : index
    %c0_22 = arith.constant 0 : index
    %22 = vector.load %arg8[%c0_21, %c0_22] : memref<2x64xf32, #tpu.memory_space<vmem>>, vector<2x64xf32>
    %cst_23 = arith.constant dense<0.000000e+00> : vector<2x4xf32>
    %23 = tpu.matmul %22, %21, %cst_23 {dimension_numbers = #tpu.dot_dimension_numbers<[1], [0], [0], [1], [0, 0, 1, 1], [], []>} : vector<2x64xf32>, vector<64x4xf32>, vector<2x4xf32> -> vector<2x4xf32>
    %c0_24 = arith.constant 0 : index
    %c0_25 = arith.constant 0 : index
    %24 = vector.load %arg9[%c0_24, %c0_25] : memref<1x4xf32, #tpu.memory_space<vmem>>, vector<1x4xf32>
    %25 = vector.broadcast %24 : vector<1x4xf32> to vector<2x4xf32>
    %26 = arith.addf %23, %25 : vector<2x4xf32>
    %cst_26 = arith.constant dense<0xFF800000> : vector<2xf32>
    %27 = vector.multi_reduction <maximumf>, %26, %cst_26 [1] : vector<2x4xf32> to vector<2xf32>
    %28 = vector.shape_cast %27 : vector<2xf32> to vector<2x1xf32>
    %29 = vector.broadcast %28 : vector<2x1xf32> to vector<2x4xf32>
    %30 = arith.subf %26, %29 : vector<2x4xf32>
    %31 = math.exp %30 : vector<2x4xf32>
    %cst_27 = arith.constant dense<0.000000e+00> : vector<2xf32>
    %32 = vector.multi_reduction <add>, %31, %cst_27 [1] : vector<2x4xf32> to vector<2xf32>
    %33 = vector.shape_cast %32 : vector<2xf32> to vector<2x1xf32>
    %34 = vector.broadcast %33 : vector<2x1xf32> to vector<2x4xf32>
    %35 = arith.divf %31, %34 : vector<2x4xf32>
    %c0_28 = arith.constant 0 : index
    %c0_29 = arith.constant 0 : index
    %36 = vector.load %arg10[%c0_28, %c0_29] : memref<2x4xf32, #tpu.memory_space<vmem>>, vector<2x4xf32>
    tpu.vector_store %arg10[%c0_28, %c0_29], %35 {strides = array<i32>} : memref<2x4xf32, #tpu.memory_space<vmem>>, vector<2x4xf32>,
    return
  }
}

</mosaic_0001>

<llo_original>
// kernel: tpu_custom_call.1
$region0: #{tpu_custom_call.1}
  #allocation0 [shape = 'u32[]', space=smem, size = 0x4, offset = 0x4, fixed_abs, tag = 'smem constant byte address 0x4 - core index']
  #allocation1 [shape = 'u32[144,128]{1,0:T(1,128)}', space=vmem, size = 0x12000, scoped, tag = 'internal scratch']
  %s0 = inlined_call_operand.vmem [shape: f32[64,16], index: 0, kind: input, shape index: {}]
  %s1 = inlined_call_operand.vmem [shape: f32[64,64], index: 1, kind: input, shape index: {}]
  %s2 = inlined_call_operand.vmem [shape: f32[16,16], index: 2, kind: input, shape index: {}]
  %s3 = inlined_call_operand.hbm [shape: f32[1,16], index: 3, kind: input, shape index: {}]
  %s4 = inlined_call_operand.vmem [shape: f32[16,64], index: 4, kind: input, shape index: {}]
  %s5 = inlined_call_operand.hbm [shape: f32[1,64], index: 5, kind: input, shape index: {}]
  %s6 = inlined_call_operand.vmem [shape: f32[64,64], index: 6, kind: input, shape index: {}]
  %s7 = inlined_call_operand.vmem [shape: f32[64,4], index: 7, kind: input, shape index: {}]
  %s8 = inlined_call_operand.vmem [shape: f32[2,64], index: 8, kind: input, shape index: {}]
  %s9 = inlined_call_operand.vmem [shape: f32[1,4], index: 9, kind: input, shape index: {}]
  %s10 = inlined_call_operand.hbm [shape: f32[2,4], index: 10, kind: output, shape index: {}]
  %s11 = sld [smem:[#allocation0]]
  $region58: #{tpu_custom_call.1} parent=0
    _
  %s13 = ssub.s32 1, %s11
  %s14 = scalar_select 0, %s13, %s11
  $region1: #{tpu_custom_call.1} parent=0
    #allocation2 [shape = 'u8[512]{0}', space=vmem, size = 0x400, scoped, tag = 'input window, operand 3, single buffered']
    #allocation3 [shape = 's32[1]{0}', space=sflag, size = 0x4, scoped, tag = 'scoped memory for tpu_custom_call.1']
    #allocation4 [shape = 's32[1]{0}', space=sflag, size = 0x4, scoped, tag = 'scoped memory for tpu_custom_call.1']
    #allocation5 [shape = 'u8[512]{0}', space=vmem, size = 0x400, scoped, tag = 'input window, operand 5, single buffered']
    #allocation6 [shape = 's32[1]{0}', space=sflag, size = 0x4, scoped, tag = 'scoped memory for tpu_custom_call.1']
    #allocation7 [shape = 'u8[1024]{0}', space=vmem, size = 0x400, scoped, tag = 'output window, operand 0, single buffered']
    %15 = vsyncpa [#allocation3], 0
    %16 = vsyncpa [#allocation6], 0
    %17 = vsyncpa [#allocation4], 0
    // Predicated region
    $region2: #{tpu_custom_call.1} parent=1 // pred_check
      _
    $region3: #{tpu_custom_call.1} parent=1 // pred_check_branch
      %19 = sbr.rel (0) target = $region5
    $region4: #{tpu_custom_call.1} parent=1 // pred_region
      _
    $region5: #{tpu_custom_call.1} parent=1 // pred_fallthru
      _
    // Predicated region
    $region6: #{tpu_custom_call.1} parent=1 // pred_check
      _
    $region7: #{tpu_custom_call.1} parent=1 // pred_check_branch
      %21 = sbr.rel (0) target = $region9
    $region8: #{tpu_custom_call.1} parent=1 // pred_region
      _
    $region9: #{tpu_custom_call.1} parent=1 // pred_fallthru
      _
    // Predicated region
    $region10: #{tpu_custom_call.1} parent=1 // pred_check
      _
    $region11: #{tpu_custom_call.1} parent=1 // pred_check_branch
      %23 = sbr.rel (0) target = $region13
    $region12: #{tpu_custom_call.1} parent=1 // pred_region
      _
    $region13: #{tpu_custom_call.1} parent=1 // pred_fallthru
      _
    // Predicated region
    $region14: #{tpu_custom_call.1} parent=1 // pred_check
      _
    $region15: #{tpu_custom_call.1} parent=1 // pred_check_branch
      %25 = sbr.rel (0) target = $region17
    $region16: #{tpu_custom_call.1} parent=1 // pred_region
      %s27 = ssub.s32 16, 16
      %28 = vsyncadd [#allocation3], %s27
      %s30 = sshll.u32 [#allocation2], 4
      %s31 = int_to_ptr.vmem [resolvable:$true] %s30
      %33 = dma.hbm_to_vmem [thread:$0]  %s3, 16, %s31, [#allocation3]
    $region17: #{tpu_custom_call.1} parent=1 // pred_fallthru
      _
    // Predicated region
    $region18: #{tpu_custom_call.1} parent=1 // pred_check
      _
    $region19: #{tpu_custom_call.1} parent=1 // pred_check_branch
      %35 = sbr.rel (0) target = $region21
    $region20: #{tpu_custom_call.1} parent=1 // pred_region
      _
    $region21: #{tpu_custom_call.1} parent=1 // pred_fallthru
      _
    // Predicated region
    $region22: #{tpu_custom_call.1} parent=1 // pred_check
      _
    $region23: #{tpu_custom_call.1} parent=1 // pred_check_branch
      %37 = sbr.rel (0) target = $region25
    $region24: #{tpu_custom_call.1} parent=1 // pred_region
      %s39 = ssub.s32 16, 16
      %40 = vsyncadd [#allocation6], %s39
      %s42 = sshll.u32 [#allocation5], 4
      %s43 = int_to_ptr.vmem [resolvable:$true] %s42
      %45 = dma.hbm_to_vmem [thread:$0]  %s5, 16, %s43, [#allocation6]
    $region25: #{tpu_custom_call.1} parent=1 // pred_fallthru
      _
    // Predicated region
    $region26: #{tpu_custom_call.1} parent=1 // pred_check
      _
    $region27: #{tpu_custom_call.1} parent=1 // pred_check_branch
      %47 = sbr.rel (0) target = $region29
    $region28: #{tpu_custom_call.1} parent=1 // pred_region
      _
    $region29: #{tpu_custom_call.1} parent=1 // pred_fallthru
      _
    // Predicated region
    $region30: #{tpu_custom_call.1} parent=1 // pred_check
      _
    $region31: #{tpu_custom_call.1} parent=1 // pred_check_branch
      %49 = sbr.rel (0) target = $region33
    $region32: #{tpu_custom_call.1} parent=1 // pred_region
      _
    $region33: #{tpu_custom_call.1} parent=1 // pred_fallthru
      _
    // Predicated region
    $region34: #{tpu_custom_call.1} parent=1 // pred_check
      _
    $region35: #{tpu_custom_call.1} parent=1 // pred_check_branch
      %51 = sbr.rel (0) target = $region37
    $region36: #{tpu_custom_call.1} parent=1 // pred_region
      _
    $region37: #{tpu_custom_call.1} parent=1 // pred_fallthru
      _
    // Predicated region
    $region38: #{tpu_custom_call.1} parent=1 // pred_check
      _
    $region39: #{tpu_custom_call.1} parent=1 // pred_check_branch
      %53 = sbr.rel (0) target = $region41
    $region40: #{tpu_custom_call.1} parent=1 // pred_region
      _
    $region41: #{tpu_custom_call.1} parent=1 // pred_fallthru
      _
    // Predicated region
    $region42: #{tpu_custom_call.1} parent=1 // pred_check
      _
    $region43: #{tpu_custom_call.1} parent=1 // pred_check_branch
      %55 = sbr.rel (0) target = $region45
    $region44: #{tpu_custom_call.1} parent=1 // pred_region
      %56 = dma.done [#allocation3], 16
    $region45: #{tpu_custom_call.1} parent=1 // pred_fallthru
      _
    // Predicated region
    $region46: #{tpu_custom_call.1} parent=1 // pred_check
      _
    $region47: #{tpu_custom_call.1} parent=1 // pred_check_branch
      %58 = sbr.rel (0) target = $region49
    $region48: #{tpu_custom_call.1} parent=1 // pred_region
      %59 = dma.done [#allocation6], 16
    $region49: #{tpu_custom_call.1} parent=1 // pred_fallthru
      _
    %v60 = vld [vmem:[%s1] sm:$0xff]
    %v61 = vld [vmem:[%s1 + $0x8] sm:$0xff]
    %v62 = vld [vmem:[%s1 + $0x10] sm:$0xff]
    %v63 = vld [vmem:[%s1 + $0x18] sm:$0xff]
    %v64 = vld [vmem:[%s1 + $0x20] sm:$0xff]
    %v65 = vld [vmem:[%s1 + $0x28] sm:$0xff]
    %v66 = vld [vmem:[%s1 + $0x30] sm:$0xff]
    %v67 = vld [vmem:[%s1 + $0x38] sm:$0xff]
    %v68 = vld [vmem:[%s0] sm:$0xff]
    %v69 = vld [vmem:[%s0 + $0x8] sm:$0xff]
    %v70 = vld [vmem:[%s0 + $0x10] sm:$0xff]
    %v71 = vld [vmem:[%s0 + $0x18] sm:$0xff]
    %v72 = vld [vmem:[%s0 + $0x20] sm:$0xff]
    %v73 = vld [vmem:[%s0 + $0x28] sm:$0xff]
    %v74 = vld [vmem:[%s0 + $0x30] sm:$0xff]
    %v75 = vld [vmem:[%s0 + $0x38] sm:$0xff]
    %vm76 = vcmask 523264
    %v78 = vsel %vm76, %v60, 0
    %v81 = vsel %vm76, %v61, 0
    %v84 = vsel %vm76, %v62, 0
    %v87 = vsel %vm76, %v63, 0
    %v90 = vsel %vm76, %v64, 0
    %v93 = vsel %vm76, %v65, 0
    %v96 = vsel %vm76, %v66, 0
    %v99 = vsel %vm76, %v67, 0
    %101 = vmatprep.subr.mxu0 0.0
    %102 = vmatpush1.msra.mxu0 %v68
    %103 = vmatprep.subr.mxu0 0.0
    %104 = vmatpush1.msra.mxu0 %v69
    %105 = vmatprep.subr.mxu0 0.0
    %106 = vmatpush1.msra.mxu0 %v70
    %107 = vmatprep.subr.mxu0 0.0
    %108 = vmatpush1.msra.mxu0 %v71
    %109 = vmatprep.subr.mxu0 0.0
    %110 = vmatpush1.msra.mxu0 %v72
    %111 = vmatprep.subr.mxu0 0.0
    %112 = vmatpush1.msra.mxu0 %v73
    %113 = vmatprep.subr.mxu0 0.0
    %114 = vmatpush1.msra.mxu0 %v74
    %115 = vmatprep.subr.mxu0 0.0
    %116 = vmatpush1.msra.mxu0 %v75
    %117 = vmatprep.subr.mxu0 0.0
    %118 = vmatpush1.msra.mxu0 0.0
    %119 = vmatprep.subr.mxu0 0.0
    %120 = vmatpush1.msra.mxu0 0.0
    %121 = vmatprep.subr.mxu0 0.0
    %122 = vmatpush1.msra.mxu0 0.0
    %123 = vmatprep.subr.mxu0 0.0
    %124 = vmatpush1.msra.mxu0 0.0
    %125 = vmatprep.subr.mxu0 0.0
    %126 = vmatpush1.msra.mxu0 0.0
    %127 = vmatprep.subr.mxu0 0.0
    %128 = vmatpush1.msra.mxu0 0.0
    %129 = vmatprep.subr.mxu0 0.0
    %130 = vmatpush1.msra.mxu0 0.0
    %131 = vmatprep.subr.mxu0 0.0
    %132 = vmatpush1.msra.mxu0 0.0
    %133 = vmatprep.subr.mxu0 0.0
    %134 = vmatpush1.msra.mxu0 0.0
    %135 = vmatprep.subr.mxu0 0.0
    %136 = vmatpush1.msra.mxu0 0.0
    %137 = vmatprep.subr.mxu0 0.0
    %138 = vmatpush1.msra.mxu0 0.0
    %139 = vmatprep.subr.mxu0 0.0
    %140 = vmatpush1.msra.mxu0 0.0
    %141 = vmatprep.subr.mxu0 0.0
    %142 = vmatpush1.msra.mxu0 0.0
    %143 = vmatprep.subr.mxu0 0.0
    %144 = vmatpush1.msra.mxu0 0.0
    %145 = vmatprep.subr.mxu0 0.0
    %146 = vmatpush1.msra.mxu0 0.0
    %147 = vmatprep.subr.mxu0 0.0
    %148 = vmatpush1.msra.mxu0 0.0
    %149 = vmatprep.subr.mxu0 0.0
    %150 = vmatpush1.msra.mxu0 0.0
    %151 = vmatprep.subr.mxu0 0.0
    %152 = vmatpush1.msra.mxu0 0.0
    %153 = vmatprep.subr.mxu0 0.0
    %154 = vmatpush1.msra.mxu0 0.0
    %155 = vmatprep.subr.mxu0 0.0
    %156 = vmatpush1.msra.mxu0 0.0
    %157 = vmatprep.subr.mxu0 0.0
    %158 = vmatpush1.msra.mxu0 0.0
    %159 = vmatprep.subr.mxu0 0.0
    %160 = vmatpush1.msra.mxu0 0.0
    %161 = vmatprep.subr.mxu0 0.0
    %162 = vmatpush1.msra.mxu0 0.0
    %163 = vmatprep.subr.mxu0 0.0
    %164 = vmatpush1.msra.mxu0 0.0
    %165 = vmatprep.mubr.f32.mxu0 0.0
    %166 = vmatmul.mubr.f32.gmra.mrb[0].mxu0 %v78
    %v167 = vpop.f32.mrb[0].mxu0
    %v168 = vadd.f32 0.0, %v167
    %v169 = vpop.f32.mrb[0].mxu0
    %170 = vmatprep.mubr.f32.mxu0 0.0
    %171 = vmatmul.mubr.f32.gmra.mrb[0].mxu0 %v81
    %v172 = vpop.f32.mrb[0].mxu0
    %v173 = vadd.f32 0.0, %v172
    %v174 = vpop.f32.mrb[0].mxu0
    %175 = vmatprep.mubr.f32.mxu0 0.0
    %176 = vmatmul.mubr.f32.gmra.mrb[0].mxu0 %v84
    %v177 = vpop.f32.mrb[0].mxu0
    %v178 = vadd.f32 0.0, %v177
    %v179 = vpop.f32.mrb[0].mxu0
    %180 = vmatprep.mubr.f32.mxu0 0.0
    %181 = vmatmul.mubr.f32.gmra.mrb[0].mxu0 %v87
    %v182 = vpop.f32.mrb[0].mxu0
    %v183 = vadd.f32 0.0, %v182
    %v184 = vpop.f32.mrb[0].mxu0
    %185 = vmatprep.mubr.f32.mxu0 0.0
    %186 = vmatmul.mubr.f32.gmra.mrb[0].mxu0 %v90
    %v187 = vpop.f32.mrb[0].mxu0
    %v188 = vadd.f32 0.0, %v187
    %v189 = vpop.f32.mrb[0].mxu0
    %190 = vmatprep.mubr.f32.mxu0 0.0
    %191 = vmatmul.mubr.f32.gmra.mrb[0].mxu0 %v93
    %v192 = vpop.f32.mrb[0].mxu0
    %v193 = vadd.f32 0.0, %v192
    %v194 = vpop.f32.mrb[0].mxu0
    %195 = vmatprep.mubr.f32.mxu0 0.0
    %196 = vmatmul.mubr.f32.gmra.mrb[0].mxu0 %v96
    %v197 = vpop.f32.mrb[0].mxu0
    %v198 = vadd.f32 0.0, %v197
    %v199 = vpop.f32.mrb[0].mxu0
    %200 = vmatprep.mubr.f32.mxu0 0.0
    %201 = vmatmul.mubr.f32.gmra.mrb[0].mxu0 %v99
    %v202 = vpop.f32.mrb[0].mxu0
    %v203 = vadd.f32 0.0, %v202
    %v204 = vpop.f32.mrb[0].mxu0
    %205 = vdwg.mxu0
    %v206 = vld [vmem:[%s2] sm:$0xff]
    %v207 = vld [vmem:[%s2 + $0x8] sm:$0xff]
    %v208 = vld [vmem:[#allocation2] sm:$0x1]
    %v210 = vlaneseq
    %v211 = vshrl.u32 %v210, 7
    %v212 = vsub.s32 0, %v211
    %v213 = vrot.slane %v208, %v212
    %vm215 = vcmask 130048
    %v217 = vsel %vm215, %v168, 0
    %v220 = vsel %vm215, %v173, 0
    %v223 = vsel %vm215, %v178, 0
    %v226 = vsel %vm215, %v183, 0
    %v229 = vsel %vm215, %v188, 0
    %v232 = vsel %vm215, %v193, 0
    %v235 = vsel %vm215, %v198, 0
    %v238 = vsel %vm215, %v203, 0
    %240 = vmatprep.subr.mxu0 0.0
    %241 = vmatpush1.msra.mxu0 %v206
    %242 = vmatprep.subr.mxu0 0.0
    %243 = vmatpush1.msra.mxu0 %v207
    %244 = vmatprep.subr.mxu0 0.0
    %245 = vmatpush1.msra.mxu0 0.0
    %246 = vmatprep.subr.mxu0 0.0
    %247 = vmatpush1.msra.mxu0 0.0
    %248 = vmatprep.subr.mxu0 0.0
    %249 = vmatpush1.msra.mxu0 0.0
    %250 = vmatprep.subr.mxu0 0.0
    %251 = vmatpush1.msra.mxu0 0.0
    %252 = vmatprep.subr.mxu0 0.0
    %253 = vmatpush1.msra.mxu0 0.0
    %254 = vmatprep.subr.mxu0 0.0
    %255 = vmatpush1.msra.mxu0 0.0
    %256 = vmatprep.subr.mxu0 0.0
    %257 = vmatpush1.msra.mxu0 0.0
    %258 = vmatprep.subr.mxu0 0.0
    %259 = vmatpush1.msra.mxu0 0.0
    %260 = vmatprep.subr.mxu0 0.0
    %261 = vmatpush1.msra.mxu0 0.0
    %262 = vmatprep.subr.mxu0 0.0
    %263 = vmatpush1.msra.mxu0 0.0
    %264 = vmatprep.subr.mxu0 0.0
    %265 = vmatpush1.msra.mxu0 0.0
    %266 = vmatprep.subr.mxu0 0.0
    %267 = vmatpush1.msra.mxu0 0.0
    %268 = vmatprep.subr.mxu0 0.0
    %269 = vmatpush1.msra.mxu0 0.0
    %270 = vmatprep.subr.mxu0 0.0
    %271 = vmatpush1.msra.mxu0 0.0
    %272 = vmatprep.subr.mxu0 0.0
    %273 = vmatpush1.msra.mxu0 0.0
    %274 = vmatprep.subr.mxu0 0.0
    %275 = vmatpush1.msra.mxu0 0.0
    %276 = vmatprep.subr.mxu0 0.0
    %277 = vmatpush1.msra.mxu0 0.0
    %278 = vmatprep.subr.mxu0 0.0
    %279 = vmatpush1.msra.mxu0 0.0
    %280 = vmatprep.subr.mxu0 0.0
    %281 = vmatpush1.msra.mxu0 0.0
    %282 = vmatprep.subr.mxu0 0.0
    %283 = vmatpush1.msra.mxu0 0.0
    %284 = vmatprep.subr.mxu0 0.0
    %285 = vmatpush1.msra.mxu0 0.0
    %286 = vmatprep.subr.mxu0 0.0
    %287 = vmatpush1.msra.mxu0 0.0
    %288 = vmatprep.subr.mxu0 0.0
    %289 = vmatpush1.msra.mxu0 0.0
    %290 = vmatprep.subr.mxu0 0.0
    %291 = vmatpush1.msra.mxu0 0.0
    %292 = vmatprep.subr.mxu0 0.0
    %293 = vmatpush1.msra.mxu0 0.0
    %294 = vmatprep.subr.mxu0 0.0
    %295 = vmatpush1.msra.mxu0 0.0
    %296 = vmatprep.subr.mxu0 0.0
    %297 = vmatpush1.msra.mxu0 0.0
    %298 = vmatprep.subr.mxu0 0.0
    %299 = vmatpush1.msra.mxu0 0.0
    %300 = vmatprep.subr.mxu0 0.0
    %301 = vmatpush1.msra.mxu0 0.0
    %302 = vmatprep.subr.mxu0 0.0
    %303 = vmatpush1.msra.mxu0 0.0
    %304 = vmatprep.mubr.f32.mxu0 0.0
    %305 = vmatmul.mubr.f32.gmra.mrb[0].mxu0 %v217
    %v306 = vpop.f32.mrb[0].mxu0
    %v307 = vadd.f32 %v213, %v306
    %v308 = vpop.f32.mrb[0].mxu0
    %309 = vmatprep.mubr.f32.mxu0 0.0
    %310 = vmatmul.mubr.f32.gmra.mrb[0].mxu0 %v220
    %v311 = vpop.f32.mrb[0].mxu0
    %v312 = vadd.f32 %v213, %v311
    %v313 = vpop.f32.mrb[0].mxu0
    %314 = vmatprep.mubr.f32.mxu0 0.0
    %315 = vmatmul.mubr.f32.gmra.mrb[0].mxu0 %v223
    %v316 = vpop.f32.mrb[0].mxu0
    %v317 = vadd.f32 %v213, %v316
    %v318 = vpop.f32.mrb[0].mxu0
    %319 = vmatprep.mubr.f32.mxu0 0.0
    %320 = vmatmul.mubr.f32.gmra.mrb[0].mxu0 %v226
    %v321 = vpop.f32.mrb[0].mxu0
    %v322 = vadd.f32 %v213, %v321
    %v323 = vpop.f32.mrb[0].mxu0
    %324 = vmatprep.mubr.f32.mxu0 0.0
    %325 = vmatmul.mubr.f32.gmra.mrb[0].mxu0 %v229
    %v326 = vpop.f32.mrb[0].mxu0
    %v327 = vadd.f32 %v213, %v326
    %v328 = vpop.f32.mrb[0].mxu0
    %329 = vmatprep.mubr.f32.mxu0 0.0
    %330 = vmatmul.mubr.f32.gmra.mrb[0].mxu0 %v232
    %v331 = vpop.f32.mrb[0].mxu0
    %v332 = vadd.f32 %v213, %v331
    %v333 = vpop.f32.mrb[0].mxu0
    %334 = vmatprep.mubr.f32.mxu0 0.0
    %335 = vmatmul.mubr.f32.gmra.mrb[0].mxu0 %v235
    %v336 = vpop.f32.mrb[0].mxu0
    %v337 = vadd.f32 %v213, %v336
    %v338 = vpop.f32.mrb[0].mxu0
    %339 = vmatprep.mubr.f32.mxu0 0.0
    %340 = vmatmul.mubr.f32.gmra.mrb[0].mxu0 %v238
    %v341 = vpop.f32.mrb[0].mxu0
    %v342 = vadd.f32 %v213, %v341
    %v343 = vpop.f32.mrb[0].mxu0
    %344 = vdwg.mxu0
    %v345 = vmax.f32 %v307, 0.0
    %v346 = vmax.f32 %v312, 0.0
    %v347 = vmax.f32 %v317, 0.0
    %v348 = vmax.f32 %v322, 0.0
    %v349 = vmax.f32 %v327, 0.0
    %v350 = vmax.f32 %v332, 0.0
    %v351 = vmax.f32 %v337, 0.0
    %v352 = vmax.f32 %v342, 0.0
    %353 = vmatprep.subr.mxu0 0.0
    %354 = vmatpush1.msra.mxu0 %v345
    %355 = vmatprep.subr.mxu0 0.0
    %356 = vmatpush1.msra.mxu0 %v346
    %357 = vmatprep.subr.mxu0 0.0
    %358 = vmatpush1.msra.mxu0 %v347
    %359 = vmatprep.subr.mxu0 0.0
    %360 = vmatpush1.msra.mxu0 %v348
    %361 = vmatprep.subr.mxu0 0.0
    %362 = vmatpush1.msra.mxu0 %v349
    %363 = vmatprep.subr.mxu0 0.0
    %364 = vmatpush1.msra.mxu0 %v350
    %365 = vmatprep.subr.mxu0 0.0
    %366 = vmatpush1.msra.mxu0 %v351
    %367 = vmatprep.subr.mxu0 0.0
    %368 = vmatpush1.msra.mxu0 %v352
    %369 = vmatprep.subr.mxu0 0.0
    %370 = vmatpush1.msra.mxu0 0.0
    %371 = vmatprep.subr.mxu0 0.0
    %372 = vmatpush1.msra.mxu0 0.0
    %373 = vmatprep.subr.mxu0 0.0
    %374 = vmatpush1.msra.mxu0 0.0
    %375 = vmatprep.subr.mxu0 0.0
    %376 = vmatpush1.msra.mxu0 0.0
    %377 = vmatprep.subr.mxu0 0.0
    %378 = vmatpush1.msra.mxu0 0.0
    %379 = vmatprep.subr.mxu0 0.0
    %380 = vmatpush1.msra.mxu0 0.0
    %381 = vmatprep.subr.mxu0 0.0
    %382 = vmatpush1.msra.mxu0 0.0
    %383 = vmatprep.subr.mxu0 0.0
    %384 = vmatpush1.msra.mxu0 0.0
    %385 = vmatprep.subr.mxu0 0.0
    %386 = vmatpush1.msra.mxu0 0.0
    %387 = vmatprep.subr.mxu0 0.0
    %388 = vmatpush1.msra.mxu0 0.0
    %389 = vmatprep.subr.mxu0 0.0
    %390 = vmatpush1.msra.mxu0 0.0
    %391 = vmatprep.subr.mxu0 0.0
    %392 = vmatpush1.msra.mxu0 0.0
    %393 = vmatprep.subr.mxu0 0.0
    %394 = vmatpush1.msra.mxu0 0.0
    %395 = vmatprep.subr.mxu0 0.0
    %396 = vmatpush1.msra.mxu0 0.0
    %397 = vmatprep.subr.mxu0 0.0
    %398 = vmatpush1.msra.mxu0 0.0
    %399 = vmatprep.subr.mxu0 0.0
    %400 = vmatpush1.msra.mxu0 0.0
    %401 = vmatprep.subr.mxu0 0.0
    %402 = vmatpush1.msra.mxu0 0.0
    %403 = vmatprep.subr.mxu0 0.0
    %404 = vmatpush1.msra.mxu0 0.0
    %405 = vmatprep.subr.mxu0 0.0
    %406 = vmatpush1.msra.mxu0 0.0
    %407 = vmatprep.subr.mxu0 0.0
    %408 = vmatpush1.msra.mxu0 0.0
    %409 = vmatprep.subr.mxu0 0.0
    %410 = vmatpush1.msra.mxu0 0.0
    %411 = vmatprep.subr.mxu0 0.0
    %412 = vmatpush1.msra.mxu0 0.0
    %413 = vmatprep.subr.mxu0 0.0
    %414 = vmatpush1.msra.mxu0 0.0
    %415 = vmatprep.subr.mxu0 0.0
    %416 = vmatpush1.msra.mxu0 0.0
    %417 = vmatprep.mubr.f32.mxu0 0.0
    %418 = vmatmul.mubr.f32.gmra.mrb[0].mxu0 %v78
    %v419 = vpop.f32.mrb[0].mxu0
    %v420 = vadd.f32 0.0, %v419
    %v421 = vpop.f32.mrb[0].mxu0
    %422 = vmatprep.mubr.f32.mxu0 0.0
    %423 = vmatmul.mubr.f32.gmra.mrb[0].mxu0 %v81
    %v424 = vpop.f32.mrb[0].mxu0
    %v425 = vadd.f32 0.0, %v424
    %v426 = vpop.f32.mrb[0].mxu0
    %427 = vmatprep.mubr.f32.mxu0 0.0
    %428 = vmatmul.mubr.f32.gmra.mrb[0].mxu0 %v84
    %v429 = vpop.f32.mrb[0].mxu0
    %v430 = vadd.f32 0.0, %v429
    %v431 = vpop.f32.mrb[0].mxu0
    %432 = vmatprep.mubr.f32.mxu0 0.0
    %433 = vmatmul.mubr.f32.gmra.mrb[0].mxu0 %v87
    %v434 = vpop.f32.mrb[0].mxu0
    %v435 = vadd.f32 0.0, %v434
    %v436 = vpop.f32.mrb[0].mxu0
    %437 = vmatprep.mubr.f32.mxu0 0.0
    %438 = vmatmul.mubr.f32.gmra.mrb[0].mxu0 %v90
    %v439 = vpop.f32.mrb[0].mxu0
    %v440 = vadd.f32 0.0, %v439
    %v441 = vpop.f32.mrb[0].mxu0
    %442 = vmatprep.mubr.f32.mxu0 0.0
    %443 = vmatmul.mubr.f32.gmra.mrb[0].mxu0 %v93
    %v444 = vpop.f32.mrb[0].mxu0
    %v445 = vadd.f32 0.0, %v444
    %v446 = vpop.f32.mrb[0].mxu0
    %447 = vmatprep.mubr.f32.mxu0 0.0
    %448 = vmatmul.mubr.f32.gmra.mrb[0].mxu0 %v96
    %v449 = vpop.f32.mrb[0].mxu0
    %v450 = vadd.f32 0.0, %v449
    %v451 = vpop.f32.mrb[0].mxu0
    %452 = vmatprep.mubr.f32.mxu0 0.0
    %453 = vmatmul.mubr.f32.gmra.mrb[0].mxu0 %v99
    %v454 = vpop.f32.mrb[0].mxu0
    %v455 = vadd.f32 0.0, %v454
    %v456 = vpop.f32.mrb[0].mxu0
    %457 = vdwg.mxu0
    %v458 = vld [vmem:[%s4] sm:$0xff]
    %v459 = vld [vmem:[%s4 + $0x8] sm:$0xff]
    %v460 = vld [vmem:[#allocation5] sm:$0x1]
    %v462 = vlaneseq
    %v463 = vshrl.u32 %v462, 7
    %v464 = vsub.s32 0, %v463
    %v465 = vrot.slane %v460, %v464
    %v468 = vsel %vm215, %v420, 0
    %v471 = vsel %vm215, %v425, 0
    %v474 = vsel %vm215, %v430, 0
    %v477 = vsel %vm215, %v435, 0
    %v480 = vsel %vm215, %v440, 0
    %v483 = vsel %vm215, %v445, 0
    %v486 = vsel %vm215, %v450, 0
    %v489 = vsel %vm215, %v455, 0
    %491 = vmatprep.subr.mxu0 0.0
    %492 = vmatpush1.msra.mxu0 %v458
    %493 = vmatprep.subr.mxu0 0.0
    %494 = vmatpush1.msra.mxu0 %v459
    %495 = vmatprep.subr.mxu0 0.0
    %496 = vmatpush1.msra.mxu0 0.0
    %497 = vmatprep.subr.mxu0 0.0
    %498 = vmatpush1.msra.mxu0 0.0
    %499 = vmatprep.subr.mxu0 0.0
    %500 = vmatpush1.msra.mxu0 0.0
    %501 = vmatprep.subr.mxu0 0.0
    %502 = vmatpush1.msra.mxu0 0.0
    %503 = vmatprep.subr.mxu0 0.0
    %504 = vmatpush1.msra.mxu0 0.0
    %505 = vmatprep.subr.mxu0 0.0
    %506 = vmatpush1.msra.mxu0 0.0
    %507 = vmatprep.subr.mxu0 0.0
    %508 = vmatpush1.msra.mxu0 0.0
    %509 = vmatprep.subr.mxu0 0.0
    %510 = vmatpush1.msra.mxu0 0.0
    %511 = vmatprep.subr.mxu0 0.0
    %512 = vmatpush1.msra.mxu0 0.0
    %513 = vmatprep.subr.mxu0 0.0
    %514 = vmatpush1.msra.mxu0 0.0
    %515 = vmatprep.subr.mxu0 0.0
    %516 = vmatpush1.msra.mxu0 0.0
    %517 = vmatprep.subr.mxu0 0.0
    %518 = vmatpush1.msra.mxu0 0.0
    %519 = vmatprep.subr.mxu0 0.0
    %520 = vmatpush1.msra.mxu0 0.0
    %521 = vmatprep.subr.mxu0 0.0
    %522 = vmatpush1.msra.mxu0 0.0
    %523 = vmatprep.subr.mxu0 0.0
    %524 = vmatpush1.msra.mxu0 0.0
    %525 = vmatprep.subr.mxu0 0.0
    %526 = vmatpush1.msra.mxu0 0.0
    %527 = vmatprep.subr.mxu0 0.0
    %528 = vmatpush1.msra.mxu0 0.0
    %529 = vmatprep.subr.mxu0 0.0
    %530 = vmatpush1.msra.mxu0 0.0
    %531 = vmatprep.subr.mxu0 0.0
    %532 = vmatpush1.msra.mxu0 0.0
    %533 = vmatprep.subr.mxu0 0.0
    %534 = vmatpush1.msra.mxu0 0.0
    %535 = vmatprep.subr.mxu0 0.0
    %536 = vmatpush1.msra.mxu0 0.0
    %537 = vmatprep.subr.mxu0 0.0
    %538 = vmatpush1.msra.mxu0 0.0
    %539 = vmatprep.subr.mxu0 0.0
    %540 = vmatpush1.msra.mxu0 0.0
    %541 = vmatprep.subr.mxu0 0.0
    %542 = vmatpush1.msra.mxu0 0.0
    %543 = vmatprep.subr.mxu0 0.0
    %544 = vmatpush1.msra.mxu0 0.0
    %545 = vmatprep.subr.mxu0 0.0
    %546 = vmatpush1.msra.mxu0 0.0
    %547 = vmatprep.subr.mxu0 0.0
    %548 = vmatpush1.msra.mxu0 0.0
    %549 = vmatprep.subr.mxu0 0.0
    %550 = vmatpush1.msra.mxu0 0.0
    %551 = vmatprep.subr.mxu0 0.0
    %552 = vmatpush1.msra.mxu0 0.0
    %553 = vmatprep.subr.mxu0 0.0
    %554 = vmatpush1.msra.mxu0 0.0
    %555 = vmatprep.mubr.f32.mxu0 0.0
    %556 = vmatmul.mubr.f32.gmra.mrb[0].mxu0 %v468
    %v557 = vpop.f32.mrb[0].mxu0
    %v558 = vadd.f32 %v465, %v557
    %v559 = vpop.f32.mrb[0].mxu0
    %560 = vmatprep.mubr.f32.mxu0 0.0
    %561 = vmatmul.mubr.f32.gmra.mrb[0].mxu0 %v471
    %v562 = vpop.f32.mrb[0].mxu0
    %v563 = vadd.f32 %v465, %v562
    %v564 = vpop.f32.mrb[0].mxu0
    %565 = vmatprep.mubr.f32.mxu0 0.0
    %566 = vmatmul.mubr.f32.gmra.mrb[0].mxu0 %v474
    %v567 = vpop.f32.mrb[0].mxu0
    %v568 = vadd.f32 %v465, %v567
    %v569 = vpop.f32.mrb[0].mxu0
    %570 = vmatprep.mubr.f32.mxu0 0.0
    %571 = vmatmul.mubr.f32.gmra.mrb[0].mxu0 %v477
    %v572 = vpop.f32.mrb[0].mxu0
    %v573 = vadd.f32 %v465, %v572
    %v574 = vpop.f32.mrb[0].mxu0
    %575 = vmatprep.mubr.f32.mxu0 0.0
    %576 = vmatmul.mubr.f32.gmra.mrb[0].mxu0 %v480
    %v577 = vpop.f32.mrb[0].mxu0
    %v578 = vadd.f32 %v465, %v577
    %v579 = vpop.f32.mrb[0].mxu0
    %580 = vmatprep.mubr.f32.mxu0 0.0
    %581 = vmatmul.mubr.f32.gmra.mrb[0].mxu0 %v483
    %v582 = vpop.f32.mrb[0].mxu0
    %v583 = vadd.f32 %v465, %v582
    %v584 = vpop.f32.mrb[0].mxu0
    %585 = vmatprep.mubr.f32.mxu0 0.0
    %586 = vmatmul.mubr.f32.gmra.mrb[0].mxu0 %v486
    %v587 = vpop.f32.mrb[0].mxu0
    %v588 = vadd.f32 %v465, %v587
    %v589 = vpop.f32.mrb[0].mxu0
    %590 = vmatprep.mubr.f32.mxu0 0.0
    %591 = vmatmul.mubr.f32.gmra.mrb[0].mxu0 %v489
    %v592 = vpop.f32.mrb[0].mxu0
    %v593 = vadd.f32 %v465, %v592
    %v594 = vpop.f32.mrb[0].mxu0
    %595 = vdwg.mxu0
    %v596 = vmax.f32 %v558, 0.0
    %v597 = vmax.f32 %v563, 0.0
    %v598 = vmax.f32 %v568, 0.0
    %v599 = vmax.f32 %v573, 0.0
    %v600 = vmax.f32 %v578, 0.0
    %v601 = vmax.f32 %v583, 0.0
    %v602 = vmax.f32 %v588, 0.0
    %v603 = vmax.f32 %v593, 0.0
    %v604 = vld [vmem:[%s6] sm:$0xff]
    %v605 = vld [vmem:[%s6 + $0x8] sm:$0xff]
    %v606 = vld [vmem:[%s6 + $0x10] sm:$0xff]
    %v607 = vld [vmem:[%s6 + $0x18] sm:$0xff]
    %v608 = vld [vmem:[%s6 + $0x20] sm:$0xff]
    %v609 = vld [vmem:[%s6 + $0x28] sm:$0xff]
    %v610 = vld [vmem:[%s6 + $0x30] sm:$0xff]
    %v611 = vld [vmem:[%s6 + $0x38] sm:$0xff]
    %v612 = vmul.f32 %v596, %v604
    %v613 = vmul.f32 %v597, %v605
    %v614 = vmul.f32 %v598, %v606
    %v615 = vmul.f32 %v599, %v607
    %v616 = vmul.f32 %v600, %v608
    %v617 = vmul.f32 %v601, %v609
    %v618 = vmul.f32 %v602, %v610
    %v619 = vmul.f32 %v603, %v611
    %v620 = vld [vmem:[%s7] sm:$0xff]
    %v621 = vld [vmem:[%s7 + $0x8] sm:$0xff]
    %v622 = vld [vmem:[%s7 + $0x10] sm:$0xff]
    %v623 = vld [vmem:[%s7 + $0x18] sm:$0xff]
    %v624 = vld [vmem:[%s7 + $0x20] sm:$0xff]
    %v625 = vld [vmem:[%s7 + $0x28] sm:$0xff]
    %v626 = vld [vmem:[%s7 + $0x30] sm:$0xff]
    %v627 = vld [vmem:[%s7 + $0x38] sm:$0xff]
    %v629 = vsel %vm76, %v612, 0
    %v632 = vsel %vm76, %v613, 0
    %v635 = vsel %vm76, %v614, 0
    %v638 = vsel %vm76, %v615, 0
    %v641 = vsel %vm76, %v616, 0
    %v644 = vsel %vm76, %v617, 0
    %v647 = vsel %vm76, %v618, 0
    %v650 = vsel %vm76, %v619, 0
    %652 = vmatprep.subr.mxu0 0.0
    %653 = vmatpush1.msra.mxu0 %v620
    %654 = vmatprep.subr.mxu0 0.0
    %655 = vmatpush1.msra.mxu0 %v621
    %656 = vmatprep.subr.mxu0 0.0
    %657 = vmatpush1.msra.mxu0 %v622
    %658 = vmatprep.subr.mxu0 0.0
    %659 = vmatpush1.msra.mxu0 %v623
    %660 = vmatprep.subr.mxu0 0.0
    %661 = vmatpush1.msra.mxu0 %v624
    %662 = vmatprep.subr.mxu0 0.0
    %663 = vmatpush1.msra.mxu0 %v625
    %664 = vmatprep.subr.mxu0 0.0
    %665 = vmatpush1.msra.mxu0 %v626
    %666 = vmatprep.subr.mxu0 0.0
    %667 = vmatpush1.msra.mxu0 %v627
    %668 = vmatprep.subr.mxu0 0.0
    %669 = vmatpush1.msra.mxu0 0.0
    %670 = vmatprep.subr.mxu0 0.0
    %671 = vmatpush1.msra.mxu0 0.0
    %672 = vmatprep.subr.mxu0 0.0
    %673 = vmatpush1.msra.mxu0 0.0
    %674 = vmatprep.subr.mxu0 0.0
    %675 = vmatpush1.msra.mxu0 0.0
    %676 = vmatprep.subr.mxu0 0.0
    %677 = vmatpush1.msra.mxu0 0.0
    %678 = vmatprep.subr.mxu0 0.0
    %679 = vmatpush1.msra.mxu0 0.0
    %680 = vmatprep.subr.mxu0 0.0
    %681 = vmatpush1.msra.mxu0 0.0
    %682 = vmatprep.subr.mxu0 0.0
    %683 = vmatpush1.msra.mxu0 0.0
    %684 = vmatprep.subr.mxu0 0.0
    %685 = vmatpush1.msra.mxu0 0.0
    %686 = vmatprep.subr.mxu0 0.0
    %687 = vmatpush1.msra.mxu0 0.0
    %688 = vmatprep.subr.mxu0 0.0
    %689 = vmatpush1.msra.mxu0 0.0
    %690 = vmatprep.subr.mxu0 0.0
    %691 = vmatpush1.msra.mxu0 0.0
    %692 = vmatprep.subr.mxu0 0.0
    %693 = vmatpush1.msra.mxu0 0.0
    %694 = vmatprep.subr.mxu0 0.0
    %695 = vmatpush1.msra.mxu0 0.0
    %696 = vmatprep.subr.mxu0 0.0
    %697 = vmatpush1.msra.mxu0 0.0
    %698 = vmatprep.subr.mxu0 0.0
    %699 = vmatpush1.msra.mxu0 0.0
    %700 = vmatprep.subr.mxu0 0.0
    %701 = vmatpush1.msra.mxu0 0.0
    %702 = vmatprep.subr.mxu0 0.0
    %703 = vmatpush1.msra.mxu0 0.0
    %704 = vmatprep.subr.mxu0 0.0
    %705 = vmatpush1.msra.mxu0 0.0
    %706 = vmatprep.subr.mxu0 0.0
    %707 = vmatpush1.msra.mxu0 0.0
    %708 = vmatprep.subr.mxu0 0.0
    %709 = vmatpush1.msra.mxu0 0.0
    %710 = vmatprep.subr.mxu0 0.0
    %711 = vmatpush1.msra.mxu0 0.0
    %712 = vmatprep.subr.mxu0 0.0
    %713 = vmatpush1.msra.mxu0 0.0
    %714 = vmatprep.subr.mxu0 0.0
    %715 = vmatpush1.msra.mxu0 0.0
    %716 = vmatprep.mubr.f32.mxu0 0.0
    %717 = vmatmul.mubr.f32.gmra.mrb[0].mxu0 %v629
    %v718 = vpop.f32.mrb[0].mxu0
    %v719 = vadd.f32 0.0, %v718
    %v720 = vpop.f32.mrb[0].mxu0
    %721 = vmatprep.mubr.f32.mxu0 0.0
    %722 = vmatmul.mubr.f32.gmra.mrb[0].mxu0 %v632
    %v723 = vpop.f32.mrb[0].mxu0
    %v724 = vadd.f32 0.0, %v723
    %v725 = vpop.f32.mrb[0].mxu0
    %726 = vmatprep.mubr.f32.mxu0 0.0
    %727 = vmatmul.mubr.f32.gmra.mrb[0].mxu0 %v635
    %v728 = vpop.f32.mrb[0].mxu0
    %v729 = vadd.f32 0.0, %v728
    %v730 = vpop.f32.mrb[0].mxu0
    %731 = vmatprep.mubr.f32.mxu0 0.0
    %732 = vmatmul.mubr.f32.gmra.mrb[0].mxu0 %v638
    %v733 = vpop.f32.mrb[0].mxu0
    %v734 = vadd.f32 0.0, %v733
    %v735 = vpop.f32.mrb[0].mxu0
    %736 = vmatprep.mubr.f32.mxu0 0.0
    %737 = vmatmul.mubr.f32.gmra.mrb[0].mxu0 %v641
    %v738 = vpop.f32.mrb[0].mxu0
    %v739 = vadd.f32 0.0, %v738
    %v740 = vpop.f32.mrb[0].mxu0
    %741 = vmatprep.mubr.f32.mxu0 0.0
    %742 = vmatmul.mubr.f32.gmra.mrb[0].mxu0 %v644
    %v743 = vpop.f32.mrb[0].mxu0
    %v744 = vadd.f32 0.0, %v743
    %v745 = vpop.f32.mrb[0].mxu0
    %746 = vmatprep.mubr.f32.mxu0 0.0
    %747 = vmatmul.mubr.f32.gmra.mrb[0].mxu0 %v647
    %v748 = vpop.f32.mrb[0].mxu0
    %v749 = vadd.f32 0.0, %v748
    %v750 = vpop.f32.mrb[0].mxu0
    %751 = vmatprep.mubr.f32.mxu0 0.0
    %752 = vmatmul.mubr.f32.gmra.mrb[0].mxu0 %v650
    %v753 = vpop.f32.mrb[0].mxu0
    %v754 = vadd.f32 0.0, %v753
    %v755 = vpop.f32.mrb[0].mxu0
    %756 = vdwg.mxu0
    %v757 = vld [vmem:[%s8] sm:$0x3]
    %v758 = vld [vmem:[%s9] sm:$0x1]
    %v760 = vlaneseq
    %v761 = vshrl.u32 %v760, 7
    %v762 = vsub.s32 0, %v761
    %v763 = vrot.slane %v758, %v762
    %v766 = vsel %vm76, %v757, 0
    %768 = vmatprep.subr.mxu0 0.0
    %769 = vmatpush1.msra.mxu0 %v719
    %770 = vmatprep.subr.mxu0 0.0
    %771 = vmatpush1.msra.mxu0 %v724
    %772 = vmatprep.subr.mxu0 0.0
    %773 = vmatpush1.msra.mxu0 %v729
    %774 = vmatprep.subr.mxu0 0.0
    %775 = vmatpush1.msra.mxu0 %v734
    %776 = vmatprep.subr.mxu0 0.0
    %777 = vmatpush1.msra.mxu0 %v739
    %778 = vmatprep.subr.mxu0 0.0
    %779 = vmatpush1.msra.mxu0 %v744
    %780 = vmatprep.subr.mxu0 0.0
    %781 = vmatpush1.msra.mxu0 %v749
    %782 = vmatprep.subr.mxu0 0.0
    %783 = vmatpush1.msra.mxu0 %v754
    %784 = vmatprep.subr.mxu0 0.0
    %785 = vmatpush1.msra.mxu0 0.0
    %786 = vmatprep.subr.mxu0 0.0
    %787 = vmatpush1.msra.mxu0 0.0
    %788 = vmatprep.subr.mxu0 0.0
    %789 = vmatpush1.msra.mxu0 0.0
    %790 = vmatprep.subr.mxu0 0.0
    %791 = vmatpush1.msra.mxu0 0.0
    %792 = vmatprep.subr.mxu0 0.0
    %793 = vmatpush1.msra.mxu0 0.0
    %794 = vmatprep.subr.mxu0 0.0
    %795 = vmatpush1.msra.mxu0 0.0
    %796 = vmatprep.subr.mxu0 0.0
    %797 = vmatpush1.msra.mxu0 0.0
    %798 = vmatprep.subr.mxu0 0.0
    %799 = vmatpush1.msra.mxu0 0.0
    %800 = vmatprep.subr.mxu0 0.0
    %801 = vmatpush1.msra.mxu0 0.0
    %802 = vmatprep.subr.mxu0 0.0
    %803 = vmatpush1.msra.mxu0 0.0
    %804 = vmatprep.subr.mxu0 0.0
    %805 = vmatpush1.msra.mxu0 0.0
    %806 = vmatprep.subr.mxu0 0.0
    %807 = vmatpush1.msra.mxu0 0.0
    %808 = vmatprep.subr.mxu0 0.0
    %809 = vmatpush1.msra.mxu0 0.0
    %810 = vmatprep.subr.mxu0 0.0
    %811 = vmatpush1.msra.mxu0 0.0
    %812 = vmatprep.subr.mxu0 0.0
    %813 = vmatpush1.msra.mxu0 0.0
    %814 = vmatprep.subr.mxu0 0.0
    %815 = vmatpush1.msra.mxu0 0.0
    %816 = vmatprep.subr.mxu0 0.0
    %817 = vmatpush1.msra.mxu0 0.0
    %818 = vmatprep.subr.mxu0 0.0
    %819 = vmatpush1.msra.mxu0 0.0
    %820 = vmatprep.subr.mxu0 0.0
    %821 = vmatpush1.msra.mxu0 0.0
    %822 = vmatprep.subr.mxu0 0.0
    %823 = vmatpush1.msra.mxu0 0.0
    %824 = vmatprep.subr.mxu0 0.0
    %825 = vmatpush1.msra.mxu0 0.0
    %826 = vmatprep.subr.mxu0 0.0
    %827 = vmatpush1.msra.mxu0 0.0
    %828 = vmatprep.subr.mxu0 0.0
    %829 = vmatpush1.msra.mxu0 0.0
    %830 = vmatprep.subr.mxu0 0.0
    %831 = vmatpush1.msra.mxu0 0.0
    %832 = vmatprep.mubr.f32.mxu0 0.0
    %833 = vmatmul.mubr.f32.gmra.mrb[0].mxu0 %v766
    %v834 = vpop.f32.mrb[0].mxu0
    %v835 = vadd.f32 %v763, %v834
    %v836 = vpop.f32.mrb[0].mxu0
    %837 = vdwg.mxu0
    %vm838 = vcmask 25600
    %v839 = vsel %vm838, %v835, -inf
    %840 = vmax.xlane.f32.xlu0 %v839
    %v841 = vpop.xlane.xlu0 %840
    %v842 = vsub.f32 %v835, %v841
    %v843 = vmul.f32 %v842, 1.442695
    %v844 = vpow.pop %v843
    %v845 = vsel %vm838, %v844, 0.0
    %846 = vadd.xlane.f32.xlu0 %v845
    %v847 = vpop.xlane.xlu0 %846
    %v848 = vrcp.pop %v847
    %v849 = vmul.f32 %v844, %v848
    %850 = vst.msk [vmem:[#allocation7] sm:$0x3] %vm838, %v849
    // Predicated region
    $region50: #{tpu_custom_call.1} parent=1 // pred_check
      _
    $region51: #{tpu_custom_call.1} parent=1 // pred_check_branch
      %852 = sbr.rel (0) target = $region53
    $region52: #{tpu_custom_call.1} parent=1 // pred_region
      %s854 = ssub.s32 32, 32
      %855 = vsyncadd [#allocation4], %s854
      %s857 = sshll.u32 [#allocation7], 4
      %s858 = int_to_ptr.vmem [resolvable:$true] %s857
      %860 = dma.vmem_to_hbm [thread:$0]  %s858, 32, %s10, [#allocation4]
    $region53: #{tpu_custom_call.1} parent=1 // pred_fallthru
      _
    // Predicated region
    $region54: #{tpu_custom_call.1} parent=1 // pred_check
      _
    $region55: #{tpu_custom_call.1} parent=1 // pred_check_branch
      %862 = sbr.rel (0) target = $region57
    $region56: #{tpu_custom_call.1} parent=1 // pred_region
      %863 = dma.done [#allocation4], 32
    $region57: #{tpu_custom_call.1} parent=1 // pred_fallthru
      _
    %864 = vsyncpa [#allocation3], 1
    %865 = vsyncpa [#allocation6], 1
    %866 = vsyncpa [#allocation4], 1

</llo_original>
